<compile_context>
chip_gen: v7x
topology: tpu7x:2x2x1
jax: 0.10.0
libtpu: 0.0.40
codegen_flags: <defaults>
</compile_context>

<pallas_src>
import numpy as np
import jax
import jax.numpy as jnp
from jax.experimental import pallas as pl
from jax.experimental.pallas import tpu as pltpu


def _make_triplet_kernel(margin):
    def kernel(xa_ref, xp_ref, xn_ref, out_ref):
        xa = xa_ref[...].astype(jnp.float32)            # (TQ, dim)
        xp = xp_ref[...].astype(jnp.float32)            # (TQ, dim)
        xn = xn_ref[...].astype(jnp.float32)            # (TQ, S-2, dim)
        # Positive distance once per query (anchors/positives unreplicated).
        dpos = jnp.sum((xa - xp) ** 2, axis=-1, keepdims=True)        # (TQ, 1)
        # Negative distances: broadcast each anchor against its S-2 negatives.
        dneg = jnp.sum((xa[:, None, :] - xn) ** 2, axis=-1)           # (TQ, S-2)
        hinge = jnp.maximum(dpos - dneg + margin, 0.0)                # (TQ, S-2)
        partial = jnp.sum(hinge)
        # Lane-dense, (8,128)-aligned partial-sum store; wrapper reads [i,0,0].
        out_ref[...] = jnp.broadcast_to(partial, (1, 8, 128)).astype(jnp.float32)
    return kernel


def _choose_tq(nq, S, dim, itemsize, forced_tq=None):
    """Pick a query-tile size TQ that divides nq, keeps (TQ, dim) blocks
    sublane-legal (TQ % 8 == 0 or TQ == nq) and fits the VMEM budget."""
    if forced_tq is not None:
        assert nq % forced_tq == 0, "tq must divide nq"
        return int(forced_tq)
    budget = 12 * 1024 * 1024  # double-buffered input bytes; conservative for v7x

    def live_bytes(tq):
        # anchor + positive + negatives, x2 for the pipeline's double buffer
        return 2 * (2 * tq + tq * (S - 2)) * dim * itemsize

    cands = [nq] + [d for d in range(8, nq, 8) if nq % d == 0]
    fitting = [c for c in cands if live_bytes(c) <= budget]
    if not fitting:
        aligned = [d for d in range(8, nq, 8) if nq % d == 0]
        return aligned[0] if aligned else nq
    # Prefer multiple grid steps (software pipelining) with >= ~512 negative
    # rows per block; otherwise just take the biggest tile that fits.
    pipelined = [c for c in fitting if c < nq and c * (S - 2) >= 512]
    return max(pipelined) if pipelined else max(fitting)


def triplet_loss_pallas(x, target, margin=0.1, tq=None):
    """Host glue: derive nq/S and the (data-dependent) gather indices from the
    concrete `target`, gather UNREPLICATED anchor/positive/negative rows, then
    run the distance/hinge/partial-sum hot path in a tiled Pallas kernel."""
    target_np = np.asarray(target)
    N, dim = int(x.shape[0]), int(x.shape[1])
    nq = int(np.sum(target_np == -1))
    S = N // nq

    anchor_idx = np.nonzero(target_np == -1)[0]
    pos_idx = np.nonzero(target_np == 1)[0]
    neg_idx = np.nonzero(target_np == 0)[0]

    # Unreplicated gathers: anchors/positives read once (nq rows each),
    # negatives once ((S-2)*nq rows).  Replication happens in-kernel.
    xa = jnp.take(x, jnp.asarray(anchor_idx), axis=0)                    # (nq, dim)
    xp = jnp.take(x, jnp.asarray(pos_idx), axis=0)                       # (nq, dim)
    xn = jnp.take(x, jnp.asarray(neg_idx), axis=0).reshape(nq, S - 2, dim)

    TQ = _choose_tq(nq, S, dim, x.dtype.itemsize, tq)
    num_blocks = nq // TQ

    out = pl.pallas_call(
        _make_triplet_kernel(float(margin)),
        out_shape=jax.ShapeDtypeStruct((num_blocks, 8, 128), jnp.float32),
        grid_spec=pl.GridSpec(
            grid=(num_blocks,),
            in_specs=[
                pl.BlockSpec((TQ, dim), lambda i: (i, 0)),          # anchors
                pl.BlockSpec((TQ, dim), lambda i: (i, 0)),          # positives
                pl.BlockSpec((TQ, S - 2, dim), lambda i: (i, 0, 0)),  # negatives
            ],
            out_specs=pl.BlockSpec((1, 8, 128), lambda i: (i, 0, 0)),
        ),
        compiler_params=pltpu.CompilerParams(
            dimension_semantics=("parallel",),
            vmem_limit_bytes=32 * 1024 * 1024,
        ),
    )(xa, xp, xn)
    # Final scalar reduce over the per-block partial sums.
    return jnp.sum(out[:, 0, 0])


def triplet_loss_ref(x, target, margin=0.1):
    """Pure numpy reference mirroring the PyTorch forward exactly."""
    target_np = np.asarray(target)
    x_np = np.asarray(x)
    dim = x_np.shape[1]
    nq = int(np.sum(target_np == -1))
    S = x_np.shape[0] // nq
    xa = np.repeat(x_np[target_np == -1, :], S - 2, axis=0).reshape((S - 2) * nq, dim)
    xp = np.repeat(x_np[target_np == 1, :], S - 2, axis=0).reshape((S - 2) * nq, dim)
    xn = x_np[target_np == 0, :]
    dist_pos = np.sum((xa - xp) ** 2, axis=1)
    dist_neg = np.sum((xa - xn) ** 2, axis=1)
    return np.sum(np.clip(dist_pos - dist_neg + margin, 0.0, None)).astype(np.float32)


if __name__ == "__main__":
    key = jax.random.PRNGKey(0)
    k1, k2 = jax.random.split(key)

    # Case 1: standard tuple layout [anchor(-1), positive(1), neg(0)*(S-2)],
    # nq=2 query tuples, S=6 vectors per tuple, dim=32.
    nq, S, dim = 2, 6, 32
    x1 = jax.random.normal(k1, (nq * S, dim), dtype=jnp.float32)
    t1 = np.tile(np.array([-1, 1] + [0] * (S - 2), dtype=np.int32), nq)
    loss1 = jax.block_until_ready(triplet_loss_pallas(x1, t1, margin=0.1))
    ref1 = triplet_loss_ref(x1, t1, margin=0.1)
    assert np.allclose(np.asarray(loss1), ref1, rtol=1e-4, atol=1e-4), (loss1, ref1)

    # Case 2: non-standard interleaving, forced tq=8 -> 2 grid blocks
    # (exercises the tiled partial-sum path and "parallel" grid semantics).
    nq, S, dim = 16, 6, 128
    x2 = jax.random.normal(k2, (nq * S, dim), dtype=jnp.float32)
    t2 = np.tile(np.array([0, -1, 0, 1, 0, 0], dtype=np.int32), nq)
    loss2 = jax.block_until_ready(triplet_loss_pallas(x2, t2, margin=0.1, tq=8))
    ref2 = triplet_loss_ref(x2, t2, margin=0.1)
    assert np.allclose(np.asarray(loss2), ref2, rtol=1e-4, atol=1e-4), (loss2, ref2)

    print("KERNEL_OK")
</pallas_src>

<mosaic_0001>
module attributes {stable_mosaic.version = 11 : i64} {
  func.func @kernel(%arg0: i32, %arg1: memref<2x32xf32, #tpu.memory_space<vmem>>, %arg2: memref<2x32xf32, #tpu.memory_space<vmem>>, %arg3: memref<2x4x32xf32, #tpu.memory_space<vmem>>, %arg4: memref<1x8x128xf32, #tpu.memory_space<vmem>>) attributes {dimension_semantics = [#tpu.dimension_semantics<parallel>], iteration_bounds = array<i64: 1>, scalar_prefetch = 0 : i64, scratch_operands = 0 : i64, tpu.core_type = #tpu.core_type<tc>, window_params = [{transform_indices = @transform_0, window_bounds = array<i64: 2, 32>}, {transform_indices = @transform_1, window_bounds = array<i64: 2, 32>}, {transform_indices = @transform_2, window_bounds = array<i64: 2, 4, 32>}, {transform_indices = @transform_3, window_bounds = array<i64: 1, 8, 128>}]} {
    %c0 = arith.constant 0 : index
    %c0_0 = arith.constant 0 : index
    %0 = vector.load %arg1[%c0, %c0_0] : memref<2x32xf32, #tpu.memory_space<vmem>>, vector<2x32xf32>
    %c0_1 = arith.constant 0 : index
    %c0_2 = arith.constant 0 : index
    %1 = vector.load %arg2[%c0_1, %c0_2] : memref<2x32xf32, #tpu.memory_space<vmem>>, vector<2x32xf32>
    %c0_3 = arith.constant 0 : index
    %c0_4 = arith.constant 0 : index
    %c0_5 = arith.constant 0 : index
    %2 = vector.load %arg3[%c0_3, %c0_4, %c0_5] : memref<2x4x32xf32, #tpu.memory_space<vmem>>, vector<2x4x32xf32>
    %3 = arith.subf %0, %1 : vector<2x32xf32>
    %4 = arith.mulf %3, %3 : vector<2x32xf32>
    %cst = arith.constant dense<0.000000e+00> : vector<2xf32>
    %5 = vector.multi_reduction <add>, %4, %cst [1] : vector<2x32xf32> to vector<2xf32>
    %6 = vector.shape_cast %5 : vector<2xf32> to vector<2x1xf32>
    %7 = vector.shape_cast %0 : vector<2x32xf32> to vector<2x1x32xf32>
    %8 = vector.broadcast %7 : vector<2x1x32xf32> to vector<2x4x32xf32>
    %9 = arith.subf %8, %2 : vector<2x4x32xf32>
    %10 = arith.mulf %9, %9 : vector<2x4x32xf32>
    %cst_6 = arith.constant dense<0.000000e+00> : vector<2x4xf32>
    %11 = vector.multi_reduction <add>, %10, %cst_6 [2] : vector<2x4x32xf32> to vector<2x4xf32>
    %12 = vector.broadcast %6 : vector<2x1xf32> to vector<2x4xf32>
    %13 = arith.subf %12, %11 : vector<2x4xf32>
    %cst_7 = arith.constant 1.000000e-01 : f32
    %14 = vector.broadcast %cst_7 : f32 to vector<2x4xf32>
    %15 = arith.addf %13, %14 : vector<2x4xf32>
    %cst_8 = arith.constant 0.000000e+00 : f32
    %16 = vector.broadcast %cst_8 : f32 to vector<2x4xf32>
    %17 = arith.maximumf %15, %16 : vector<2x4xf32>
    %18 = vector.shape_cast %17 : vector<2x4xf32> to vector<1x2x4xf32>
    %cst_9 = arith.constant dense<0.000000e+00> : vector<1xf32>
    %19 = vector.multi_reduction <add>, %18, %cst_9 [1, 2] : vector<1x2x4xf32> to vector<1xf32>
    %20 = vector.shape_cast %19 : vector<1xf32> to vector<1x1x1xf32>
    %21 = vector.extract %20[0, 0, 0] : f32 from vector<1x1x1xf32>
    %22 = vector.broadcast %21 : f32 to vector<1x8x128xf32>
    %c0_10 = arith.constant 0 : index
    %c0_11 = arith.constant 0 : index
    %c0_12 = arith.constant 0 : index
    %23 = vector.load %arg4[%c0_10, %c0_11, %c0_12] : memref<1x8x128xf32, #tpu.memory_space<vmem>>, vector<1x8x128xf32>
    tpu.vector_store %arg4[%c0_10, %c0_11, %c0_12], %22 {strides = array<i32>} : memref<1x8x128xf32, #tpu.memory_space<vmem>>, vector<1x8x128xf32>,
    return
  }
  func.func @transform_0(%arg0: i32) -> (i32, i32) {
    %c0_i32 = arith.constant 0 : i32
    %c0_i32_0 = arith.constant 0 : i32
    return %arg0, %c0_i32 : i32, i32
  }
  func.func @transform_1(%arg0: i32) -> (i32, i32) {
    %c0_i32 = arith.constant 0 : i32
    %c0_i32_0 = arith.constant 0 : i32
    return %arg0, %c0_i32 : i32, i32
  }
  func.func @transform_2(%arg0: i32) -> (i32, i32, i32) {
    %c0_i32 = arith.constant 0 : i32
    %c0_i32_0 = arith.constant 0 : i32
    %c0_i32_1 = arith.constant 0 : i32
    return %arg0, %c0_i32, %c0_i32_0 : i32, i32, i32
  }
  func.func @transform_3(%arg0: i32) -> (i32, i32, i32) {
    %c0_i32 = arith.constant 0 : i32
    %c0_i32_0 = arith.constant 0 : i32
    %c0_i32_1 = arith.constant 0 : i32
    return %arg0, %c0_i32, %c0_i32_0 : i32, i32, i32
  }
}

</mosaic_0001>

<llo_original>
// kernel: tpu_custom_call.1
$region0: #{tpu_custom_call.1}
  #allocation0 [shape = 'u32[]', space=smem, size = 0x4, offset = 0x4, fixed_abs, tag = 'smem constant byte address 0x4 - core index']
  #allocation1 [shape = 'u32[144,128]{1,0:T(1,128)}', space=vmem, size = 0x12000, scoped, tag = 'internal scratch']
  %s0 = inlined_call_operand.hbm [shape: f32[2,32], index: 0, kind: input, shape index: {}]
  %s1 = inlined_call_operand.vmem [shape: f32[2,32], index: 1, kind: input, shape index: {}]
  %s2 = inlined_call_operand.hbm [shape: f32[2,4,32], index: 2, kind: input, shape index: {}]
  %s3 = inlined_call_operand.hbm [shape: f32[1,8,128], index: 3, kind: output, shape index: {}]
  %s4 = sld [smem:[#allocation0]]
  $region30: #{tpu_custom_call.1} parent=0
    _
  %s6 = ssub.s32 1, %s4
  %s7 = scalar_select 0, %s6, %s4
  $region1: #{tpu_custom_call.1} parent=0
    #allocation2 [shape = 'u8[1024]{0}', space=vmem, size = 0x400, scoped, tag = 'input window, operand 0, single buffered']
    #allocation3 [shape = 's32[1]{0}', space=sflag, size = 0x4, scoped, tag = 'scoped memory for tpu_custom_call.1']
    #allocation4 [shape = 's32[1]{0}', space=sflag, size = 0x4, scoped, tag = 'scoped memory for tpu_custom_call.1']
    #allocation5 [shape = 'u8[4096]{0}', space=vmem, size = 0x1000, scoped, tag = 'input window, operand 2, single buffered']
    #allocation6 [shape = 's32[1]{0}', space=sflag, size = 0x4, scoped, tag = 'scoped memory for tpu_custom_call.1']
    #allocation7 [shape = 'u8[4096]{0}', space=vmem, size = 0x1000, scoped, tag = 'output window, operand 0, single buffered']
    %8 = vsyncpa [#allocation3], 0
    %9 = vsyncpa [#allocation6], 0
    %10 = vsyncpa [#allocation4], 0
    // Predicated region
    $region2: #{tpu_custom_call.1} parent=1 // pred_check
      _
    $region3: #{tpu_custom_call.1} parent=1 // pred_check_branch
      %12 = sbr.rel (0) target = $region5
    $region4: #{tpu_custom_call.1} parent=1 // pred_region
      %s14 = ssub.s32 32, 32
      %15 = vsyncadd [#allocation3], %s14
      %s17 = sshll.u32 [#allocation2], 4
      %s18 = int_to_ptr.vmem [resolvable:$true] %s17
      %20 = dma.hbm_to_vmem [thread:$0]  %s0, 32, %s18, [#allocation3]
    $region5: #{tpu_custom_call.1} parent=1 // pred_fallthru
      _
    // Predicated region
    $region6: #{tpu_custom_call.1} parent=1 // pred_check
      _
    $region7: #{tpu_custom_call.1} parent=1 // pred_check_branch
      %22 = sbr.rel (0) target = $region9
    $region8: #{tpu_custom_call.1} parent=1 // pred_region
      _
    $region9: #{tpu_custom_call.1} parent=1 // pred_fallthru
      _
    // Predicated region
    $region10: #{tpu_custom_call.1} parent=1 // pred_check
      _
    $region11: #{tpu_custom_call.1} parent=1 // pred_check_branch
      %24 = sbr.rel (0) target = $region13
    $region12: #{tpu_custom_call.1} parent=1 // pred_region
      %s26 = ssub.s32 128, 128
      %27 = vsyncadd [#allocation6], %s26
      %s28 = sshll.u32 [#allocation5], 4
      %s29 = int_to_ptr.vmem [resolvable:$true] %s28
      %34 = dma.hbm_to_vmem [thread:$0]  %s2, 128, %s29, [#allocation6], 64, 64, 4
    $region13: #{tpu_custom_call.1} parent=1 // pred_fallthru
      _
    // Predicated region
    $region14: #{tpu_custom_call.1} parent=1 // pred_check
      _
    $region15: #{tpu_custom_call.1} parent=1 // pred_check_branch
      %36 = sbr.rel (0) target = $region17
    $region16: #{tpu_custom_call.1} parent=1 // pred_region
      %37 = dma.done [#allocation3], 32
    $region17: #{tpu_custom_call.1} parent=1 // pred_fallthru
      _
    // Predicated region
    $region18: #{tpu_custom_call.1} parent=1 // pred_check
      _
    $region19: #{tpu_custom_call.1} parent=1 // pred_check_branch
      %39 = sbr.rel (0) target = $region21
    $region20: #{tpu_custom_call.1} parent=1 // pred_region
      %40 = dma.done [#allocation6], 128
    $region21: #{tpu_custom_call.1} parent=1 // pred_fallthru
      _
    %v41 = vld [vmem:[#allocation2] sm:$0x3]
    %v42 = vld [vmem:[%s1] sm:$0x3]
    %v43 = vld [vmem:[#allocation5] sm:$0xf]
    %v44 = vld [vmem:[#allocation5 + $0x4] sm:$0xf]
    %v45 = vsub.f32 %v41, %v42
    %v46 = vmul.f32 %v45, %v45
    %vm47 = vcmask 254976
    %v48 = vsel %vm47, %v46, 0.0
    %49 = vadd.xlane.f32.xlu0 %v48
    %v50 = vpop.xlane.xlu0 %49
    %v53 = vunpack.c.l.s4 1966171168
    %v54 = vunpack.c.0.s8 %v53
    %v55 = vlaneseq
    %v56 = vshrl.u32 %v55, 7
    %v57 = vsub.s32 %v54, %v56
    %v58 = vrot.slane %v41, %v57
    %v59 = vcombine.high %v58, %v58
    %v61 = vunpack.c.l.s4 1966171168
    %v62 = vunpack.c.0.s8 %v61
    %v63 = vlaneseq
    %v64 = vshrl.u32 %v63, 7
    %v65 = vsub.s32 %v62, %v64
    %v66 = vrot.slane %v58, %v65
    %v68 = vunpack.c.l.s4 1966171168
    %v69 = vunpack.c.0.s8 %v68
    %v70 = vlaneseq
    %v71 = vshrl.u32 %v70, 7
    %v72 = vsub.s32 %v69, %v71
    %v73 = vrot.slane %v59, %v72
    %v74 = vlaneseq
    %v75 = vshrl.u32 %v74, 7
    %v76 = vsub.s32 0, %v75
    %v77 = vrot.slane %v66, %v76
    %v78 = vlaneseq
    %v79 = vshrl.u32 %v78, 7
    %v80 = vsub.s32 0, %v79
    %v81 = vrot.slane %v73, %v80
    %v84 = vsub.f32 %v77, %v43
    %v85 = vsub.f32 %v81, %v44
    %v86 = vmul.f32 %v84, %v84
    %v87 = vmul.f32 %v85, %v85
    %vm88 = vcmask 257024
    %v89 = vsel %vm88, %v86, 0.0
    %90 = vadd.xlane.f32.xlu0 %v89
    %v91 = vpop.xlane.xlu0 %90
    %v92 = vsel %vm88, %v87, 0.0
    %93 = vadd.xlane.f32.xlu0 %v92
    %v94 = vpop.xlane.xlu0 %93
    %v97 = vlaneseq
    %v98 = vand.u32 %v97, 127
    %v99 = vlaneseq
    %v100 = vshrl.u32 %v99, 7
    %v101 = vsub.s32 %v98, %v100
    %v102 = vrot.slane %v91, %v101
    %v103 = vlaneseq
    %v104 = vshrl.u32 %v103, 7
    %v105 = vsub.s32 %v98, %v104
    %v106 = vrot.slane %v94, %v105
    %vm107 = vcmask 1041409
    %v108 = vsel %vm107, %v106, %v102
    %v110 = vsub.f32 %v50, %v108
    %v111 = vadd.f32 %v110, 0.1
    %v112 = vmax.f32 %v111, 0.0
    %vm113 = vcmask 25600
    %v114 = vsel %vm113, %v112, 0.0
    %115 = vadd.xlane.f32.xlu0 %v114
    %v116 = vpop.xlane.xlu0 %115
    %v117 = vrot.slane %v116, 4
    %v118 = vadd.f32 %v116, %v117
    %v119 = vrot.slane %v118, 2
    %v120 = vadd.f32 %v118, %v119
    %v121 = vrot.slane %v120, 1
    %v122 = vadd.f32 %v120, %v121
    %s123 = vtos %v122
    %v124 = vstv %s123
    %125 = vst [vmem:[#allocation7] sm:$0xff] %v124
    // Predicated region
    $region22: #{tpu_custom_call.1} parent=1 // pred_check
      _
    $region23: #{tpu_custom_call.1} parent=1 // pred_check_branch
      %127 = sbr.rel (0) target = $region25
    $region24: #{tpu_custom_call.1} parent=1 // pred_region
      %s129 = ssub.s32 128, 128
      %130 = vsyncadd [#allocation4], %s129
      %s132 = sshll.u32 [#allocation7], 4
      %s133 = int_to_ptr.vmem [resolvable:$true] %s132
      %135 = dma.vmem_to_hbm [thread:$0]  %s133, 128, %s3, [#allocation4]
    $region25: #{tpu_custom_call.1} parent=1 // pred_fallthru
      _
    // Predicated region
    $region26: #{tpu_custom_call.1} parent=1 // pred_check
      _
    $region27: #{tpu_custom_call.1} parent=1 // pred_check_branch
      %137 = sbr.rel (0) target = $region29
    $region28: #{tpu_custom_call.1} parent=1 // pred_region
      %138 = dma.done [#allocation4], 128
    $region29: #{tpu_custom_call.1} parent=1 // pred_fallthru
      _
    %139 = vsyncpa [#allocation3], 1
    %140 = vsyncpa [#allocation6], 1
    %141 = vsyncpa [#allocation4], 1

</llo_original>
